<compile_context>
chip_gen: v7x
topology: tpu7x:2x2x1
jax: 0.10.0
libtpu: 0.0.40
codegen_flags: <defaults>
</compile_context>

<pallas_src>
import jax
import jax.numpy as jnp
from jax.experimental import pallas as pl
from jax.experimental.pallas import tpu as pltpu


def _round_up(x: int, m: int) -> int:
    return (x + m - 1) // m * m


# --------------------------------------------------------------------------
# Fused kernel: encoder reduction phase + decoder output phase
# --------------------------------------------------------------------------
def _make_cdae_kernel(n_i: int):
    """Inner grid axis has extent 2*n_i: t < n_i encodes, t >= n_i decodes."""

    def kernel(mat_ref, enc_wt_ref, embb_ref, dec_wt_ref, dec_b_ref,
               out_ref, h_ref):
        t = pl.program_id(1)

        @pl.when(t == 0)
        def _seed():
            # Seed the f32 accumulator with user_embedding[user_idx] + enc_b
            # (folded in the wrapper) instead of zeros.
            h_ref[...] = embb_ref[...]

        @pl.when(t < n_i)
        def _encode():
            # (tb, ti) bf16 @ (ti, Hp) bf16 -> f32 accumulate on the MXU.
            h_ref[...] += jnp.dot(mat_ref[...], enc_wt_ref[...],
                                  preferred_element_type=jnp.float32)

        @pl.when(t == n_i - 1)
        def _activate():
            # Apply sigmoid once, in place, on the resident f32 scratch.
            h_ref[...] = jax.nn.sigmoid(h_ref[...])

        @pl.when(t >= n_i)
        def _decode():
            acc = jnp.dot(h_ref[...].astype(jnp.bfloat16), dec_wt_ref[...],
                          preferred_element_type=jnp.float32)
            out_ref[...] = (acc + dec_b_ref[...]).astype(out_ref.dtype)

    return kernel


# --------------------------------------------------------------------------
# Wrapper
# --------------------------------------------------------------------------
def _cdae_forward(user_idx, matrix, params):
    """CDAE eval-mode forward.

    user_idx : (B,) int32
    matrix   : (B, num_items) float32
    params   : dict with
        user_embedding (U, H) f32
        enc_wt (I, H) bf16  -- encoder.weight pre-transposed
        enc_b  (H,)   f32
        dec_wt (H, I) bf16  -- decoder.weight pre-transposed
        dec_b  (I,)   f32
    """
    B, I = matrix.shape
    H = params["enc_wt"].shape[1]

    # ---- tile / padding choices (MXU- and HBM-friendly) ----
    Hp = _round_up(H, 128)
    tb = min(_round_up(B, 8), 512)            # whole batch in one tile for B<=512
    Bp = _round_up(B, tb)
    tile_i = min(2048, _round_up(I, 128))     # encoder-K tile == decoder-N tile
    Ip = _round_up(I, tile_i)
    n_i = Ip // tile_i
    n_bt = Bp // tb
    last_k = n_i - 1

    # ---- glue: embedding gather (+ fold enc_b), padding, bf16 casts ----
    embb = params["user_embedding"][user_idx] + params["enc_b"][None, :]      # (B, H) f32
    embb_p = jnp.pad(embb, ((0, Bp - B), (0, Hp - H)))                         # (Bp, Hp)
    matrix_p = jnp.pad(matrix, ((0, Bp - B), (0, Ip - I))).astype(jnp.bfloat16)
    enc_wt_p = jnp.pad(params["enc_wt"], ((0, Ip - I), (0, Hp - H)))           # (Ip, Hp) bf16
    dec_wt_p = jnp.pad(params["dec_wt"], ((0, Hp - H), (0, Ip - I)))           # (Hp, Ip) bf16
    dec_b_p = jnp.pad(params["dec_b"], (0, Ip - I)).reshape(1, Ip)             # (1, Ip) f32

    # ---- VMEM working set (double-buffered in/out tiles + resident h) ----
    working = (2 * tb * tile_i * 2        # matrix tile (bf16)
               + 2 * tile_i * Hp * 2      # enc_wt tile (bf16)
               + 2 * tb * Hp * 4          # embedding+bias tile (f32)
               + 2 * Hp * tile_i * 2      # dec_wt tile (bf16)
               + 2 * tile_i * 4           # dec_b tile (f32)
               + 2 * tb * tile_i * 4      # output tile (f32)
               + tb * Hp * 4)             # h scratch (f32)
    vmem_limit = int(min(max(int(working * 1.5), 16 * 2**20), 40 * 2**20))

    out_p = pl.pallas_call(
        _make_cdae_kernel(n_i),
        out_shape=jax.ShapeDtypeStruct((Bp, Ip), jnp.float32),
        grid=(n_bt, 2 * n_i),
        in_specs=[
            # Encoder operands: clamped to their last block during the decode
            # phase so no redundant DMA is issued.
            pl.BlockSpec((tb, tile_i), lambda i, t: (i, jnp.minimum(t, last_k))),
            pl.BlockSpec((tile_i, Hp), lambda i, t: (jnp.minimum(t, last_k), 0)),
            pl.BlockSpec((tb, Hp), lambda i, t: (i, 0)),
            # Decoder operands: clamped to block 0 during the encode phase so
            # the first decoder weight tile is prefetched under the encoder.
            pl.BlockSpec((Hp, tile_i), lambda i, t: (0, jnp.maximum(t - n_i, 0))),
            pl.BlockSpec((1, tile_i), lambda i, t: (0, jnp.maximum(t - n_i, 0))),
        ],
        out_specs=pl.BlockSpec((tb, tile_i),
                               lambda i, t: (i, jnp.maximum(t - n_i, 0))),
        scratch_shapes=[pltpu.VMEM((tb, Hp), jnp.float32)],
        compiler_params=pltpu.CompilerParams(
            dimension_semantics=("parallel", "arbitrary"),
            vmem_limit_bytes=vmem_limit),
        cost_estimate=pl.CostEstimate(
            flops=4 * Bp * Ip * Hp,                      # encoder + decoder matmuls
            transcendentals=2 * Bp * Hp,                 # sigmoid ~2/elem
            bytes_accessed=(Bp * Ip * 2                  # matrix read (bf16)
                            + n_bt * Ip * Hp * 2 * 2     # enc_wt + dec_wt per batch tile
                            + Bp * Hp * 4                # embedding + enc_b
                            + n_bt * Ip * 4              # dec_b per batch tile
                            + Bp * Ip * 4)),             # output write (f32)
    )(matrix_p, enc_wt_p, embb_p, dec_wt_p, dec_b_p)

    return out_p[:B, :I]


cdae_forward = jax.jit(_cdae_forward)


# --------------------------------------------------------------------------
# Parameter init (weights stored pre-transposed, bf16)
# --------------------------------------------------------------------------
def init_params(key, num_users, num_items, num_hidden_units):
    k_emb, k_ew, k_eb, k_dw, k_db = jax.random.split(key, 5)
    enc_bound = 1.0 / jnp.sqrt(num_items)
    dec_bound = 1.0 / jnp.sqrt(num_hidden_units)
    enc_w = jax.random.uniform(k_ew, (num_hidden_units, num_items), jnp.float32,
                               -enc_bound, enc_bound)
    dec_w = jax.random.uniform(k_dw, (num_items, num_hidden_units), jnp.float32,
                               -dec_bound, dec_bound)
    return {
        "user_embedding": jax.random.normal(
            k_emb, (num_users, num_hidden_units), jnp.float32),
        # Pre-transposed once at init; bf16 halves HBM/VMEM traffic for the MXU.
        "enc_wt": enc_w.T.astype(jnp.bfloat16),   # (I, H)
        "enc_b": jax.random.uniform(
            k_eb, (num_hidden_units,), jnp.float32, -enc_bound, enc_bound),
        "dec_wt": dec_w.T.astype(jnp.bfloat16),   # (H, I)
        "dec_b": jax.random.uniform(
            k_db, (num_items,), jnp.float32, -dec_bound, dec_bound),
    }


if __name__ == "__main__":
    # Small, TPU-friendly shapes consistent with the module.
    num_users = 16
    num_items = 256
    num_hidden_units = 64
    batch = 8
    corruption_ratio = 0.2  # unused in eval-mode forward

    key = jax.random.PRNGKey(0)
    k_params, k_idx, k_mat = jax.random.split(key, 3)

    params = init_params(k_params, num_users, num_items, num_hidden_units)
    user_idx = jax.random.randint(k_idx, (batch,), 0, num_users, jnp.int32)
    # Implicit-feedback style binary interaction matrix (exact in bf16).
    matrix = (jax.random.uniform(k_mat, (batch, num_items)) < 0.1).astype(jnp.float32)

    out = cdae_forward(user_idx, matrix, params)
    out = jax.block_until_ready(out)

    # Pure-JAX reference mirroring the kernel's numeric path
    # (bf16 weights / matmul inputs, f32 accumulation, f32 h, bf16 decoder input).
    emb = params["user_embedding"][user_idx]
    mat_bf16 = matrix.astype(jnp.bfloat16)
    h_ref = jax.nn.sigmoid(
        jnp.dot(mat_bf16, params["enc_wt"], preferred_element_type=jnp.float32)
        + params["enc_b"][None, :] + emb)
    ref = (jnp.dot(h_ref.astype(jnp.bfloat16), params["dec_wt"],
                   preferred_element_type=jnp.float32)
           + params["dec_b"][None, :])

    assert out.shape == (batch, num_items)
    assert jnp.allclose(out, ref, atol=2e-3, rtol=2e-3), "mismatch vs reference"

    print("KERNEL_OK")
</pallas_src>

<mosaic_0001>
module attributes {stable_mosaic.version = 11 : i64} {
  func.func @kernel(%arg0: i32, %arg1: i32, %arg2: memref<8x256xbf16, #tpu.memory_space<vmem>>, %arg3: memref<256x128xbf16, #tpu.memory_space<vmem>>, %arg4: memref<8x128xf32, #tpu.memory_space<vmem>>, %arg5: memref<128x256xbf16, #tpu.memory_space<vmem>>, %arg6: memref<1x256xf32, #tpu.memory_space<vmem>>, %arg7: memref<8x256xf32, #tpu.memory_space<vmem>>, %arg8: memref<8x128xf32, #tpu.memory_space<vmem>>) attributes {dimension_semantics = [#tpu.dimension_semantics<parallel>, #tpu.dimension_semantics<arbitrary>], iteration_bounds = array<i64: 1, 2>, scalar_prefetch = 0 : i64, scratch_operands = 1 : i64, tpu.core_type = #tpu.core_type<tc>, window_params = [{transform_indices = @transform_0, window_bounds = array<i64: 8, 256>}, {transform_indices = @transform_1, window_bounds = array<i64: 256, 128>}, {transform_indices = @transform_2, window_bounds = array<i64: 8, 128>}, {transform_indices = @transform_3, window_bounds = array<i64: 128, 256>}, {transform_indices = @transform_4, window_bounds = array<i64: 1, 256>}, {transform_indices = @transform_5, window_bounds = array<i64: 8, 256>}]} {
    %c0_i32 = arith.constant 0 : i32
    %0 = arith.cmpi eq, %arg1, %c0_i32 : i32
    %1 = arith.extui %0 : i1 to i32
    %c0_i32_0 = arith.constant 0 : i32
    %2 = arith.cmpi ne, %1, %c0_i32_0 : i32
    scf.if %2 {
      %c0 = arith.constant 0 : index
      %c0_6 = arith.constant 0 : index
      %12 = vector.load %arg4[%c0, %c0_6] : memref<8x128xf32, #tpu.memory_space<vmem>>, vector<8x128xf32>
      %c0_7 = arith.constant 0 : index
      %c0_8 = arith.constant 0 : index
      %13 = vector.load %arg8[%c0_7, %c0_8] : memref<8x128xf32, #tpu.memory_space<vmem>>, vector<8x128xf32>
      tpu.vector_store %arg8[%c0_7, %c0_8], %12 {strides = array<i32>} : memref<8x128xf32, #tpu.memory_space<vmem>>, vector<8x128xf32>,
    } else {
    }
    %c1_i32 = arith.constant 1 : i32
    %3 = arith.cmpi slt, %arg1, %c1_i32 : i32
    %4 = arith.extui %3 : i1 to i32
    %c0_i32_1 = arith.constant 0 : i32
    %5 = arith.cmpi ne, %4, %c0_i32_1 : i32
    scf.if %5 {
      %c0 = arith.constant 0 : index
      %c0_6 = arith.constant 0 : index
      %12 = vector.load %arg8[%c0, %c0_6] : memref<8x128xf32, #tpu.memory_space<vmem>>, vector<8x128xf32>
      %c0_7 = arith.constant 0 : index
      %c0_8 = arith.constant 0 : index
      %13 = vector.load %arg2[%c0_7, %c0_8] : memref<8x256xbf16, #tpu.memory_space<vmem>>, vector<8x256xbf16>
      %c0_9 = arith.constant 0 : index
      %c0_10 = arith.constant 0 : index
      %14 = vector.load %arg3[%c0_9, %c0_10] : memref<256x128xbf16, #tpu.memory_space<vmem>>, vector<256x128xbf16>
      %cst = arith.constant dense<0.000000e+00> : vector<8x128xf32>
      %15 = tpu.matmul %13, %14, %cst {dimension_numbers = #tpu.dot_dimension_numbers<[1], [0], [0], [1], [0, 0, 1, 1], [], []>} : vector<8x256xbf16>, vector<256x128xbf16>, vector<8x128xf32> -> vector<8x128xf32>
      %16 = arith.addf %12, %15 : vector<8x128xf32>
      %c0_11 = arith.constant 0 : index
      %c0_12 = arith.constant 0 : index
      %17 = vector.load %arg8[%c0_11, %c0_12] : memref<8x128xf32, #tpu.memory_space<vmem>>, vector<8x128xf32>
      tpu.vector_store %arg8[%c0_11, %c0_12], %16 {strides = array<i32>} : memref<8x128xf32, #tpu.memory_space<vmem>>, vector<8x128xf32>,
    } else {
    }
    %c0_i32_2 = arith.constant 0 : i32
    %6 = arith.cmpi eq, %arg1, %c0_i32_2 : i32
    %7 = arith.extui %6 : i1 to i32
    %c0_i32_3 = arith.constant 0 : i32
    %8 = arith.cmpi ne, %7, %c0_i32_3 : i32
    scf.if %8 {
      %c0 = arith.constant 0 : index
      %c0_6 = arith.constant 0 : index
      %12 = vector.load %arg8[%c0, %c0_6] : memref<8x128xf32, #tpu.memory_space<vmem>>, vector<8x128xf32>
      %13 = arith.negf %12 : vector<8x128xf32>
      %14 = math.exp %13 : vector<8x128xf32>
      %cst = arith.constant 1.000000e+00 : f32
      %15 = vector.broadcast %cst : f32 to vector<8x128xf32>
      %16 = arith.addf %15, %14 : vector<8x128xf32>
      %17 = arith.divf %15, %16 : vector<8x128xf32>
      %c0_7 = arith.constant 0 : index
      %c0_8 = arith.constant 0 : index
      %18 = vector.load %arg8[%c0_7, %c0_8] : memref<8x128xf32, #tpu.memory_space<vmem>>, vector<8x128xf32>
      tpu.vector_store %arg8[%c0_7, %c0_8], %17 {strides = array<i32>} : memref<8x128xf32, #tpu.memory_space<vmem>>, vector<8x128xf32>,
    } else {
    }
    %c1_i32_4 = arith.constant 1 : i32
    %9 = arith.cmpi sge, %arg1, %c1_i32_4 : i32
    %10 = arith.extui %9 : i1 to i32
    %c0_i32_5 = arith.constant 0 : i32
    %11 = arith.cmpi ne, %10, %c0_i32_5 : i32
    scf.if %11 {
      %c0 = arith.constant 0 : index
      %c0_6 = arith.constant 0 : index
      %12 = vector.load %arg8[%c0, %c0_6] : memref<8x128xf32, #tpu.memory_space<vmem>>, vector<8x128xf32>
      %13 = arith.truncf %12 : vector<8x128xf32> to vector<8x128xbf16>
      %c0_7 = arith.constant 0 : index
      %c0_8 = arith.constant 0 : index
      %14 = vector.load %arg5[%c0_7, %c0_8] : memref<128x256xbf16, #tpu.memory_space<vmem>>, vector<128x256xbf16>
      %cst = arith.constant dense<0.000000e+00> : vector<8x256xf32>
      %15 = tpu.matmul %13, %14, %cst {dimension_numbers = #tpu.dot_dimension_numbers<[1], [0], [0], [1], [0, 0, 1, 1], [], []>} : vector<8x128xbf16>, vector<128x256xbf16>, vector<8x256xf32> -> vector<8x256xf32>
      %c0_9 = arith.constant 0 : index
      %c0_10 = arith.constant 0 : index
      %16 = vector.load %arg6[%c0_9, %c0_10] : memref<1x256xf32, #tpu.memory_space<vmem>>, vector<1x256xf32>
      %17 = vector.broadcast %16 : vector<1x256xf32> to vector<8x256xf32>
      %18 = arith.addf %15, %17 : vector<8x256xf32>
      %c0_11 = arith.constant 0 : index
      %c0_12 = arith.constant 0 : index
      %19 = vector.load %arg7[%c0_11, %c0_12] : memref<8x256xf32, #tpu.memory_space<vmem>>, vector<8x256xf32>
      tpu.vector_store %arg7[%c0_11, %c0_12], %18 {strides = array<i32>} : memref<8x256xf32, #tpu.memory_space<vmem>>, vector<8x256xf32>,
    } else {
    }
    return
  }
  func.func @transform_0(%arg0: i32, %arg1: i32) -> (i32, i32) {
    %c0_i32 = arith.constant 0 : i32
    %0 = arith.minsi %arg1, %c0_i32 : i32
    %c0_i32_0 = arith.constant 0 : i32
    return %arg0, %0 : i32, i32
  }
  func.func @transform_1(%arg0: i32, %arg1: i32) -> (i32, i32) {
    %c0_i32 = arith.constant 0 : i32
    %0 = arith.minsi %arg1, %c0_i32 : i32
    %c0_i32_0 = arith.constant 0 : i32
    %c0_i32_1 = arith.constant 0 : i32
    return %0, %c0_i32_0 : i32, i32
  }
  func.func @transform_2(%arg0: i32, %arg1: i32) -> (i32, i32) {
    %c0_i32 = arith.constant 0 : i32
    %c0_i32_0 = arith.constant 0 : i32
    return %arg0, %c0_i32 : i32, i32
  }
  func.func @transform_3(%arg0: i32, %arg1: i32) -> (i32, i32) {
    %c1_i32 = arith.constant 1 : i32
    %0 = arith.subi %arg1, %c1_i32 : i32
    %c0_i32 = arith.constant 0 : i32
    %1 = arith.maxsi %0, %c0_i32 : i32
    %c0_i32_0 = arith.constant 0 : i32
    %c0_i32_1 = arith.constant 0 : i32
    return %c0_i32_0, %1 : i32, i32
  }
  func.func @transform_4(%arg0: i32, %arg1: i32) -> (i32, i32) {
    %c1_i32 = arith.constant 1 : i32
    %0 = arith.subi %arg1, %c1_i32 : i32
    %c0_i32 = arith.constant 0 : i32
    %1 = arith.maxsi %0, %c0_i32 : i32
    %c0_i32_0 = arith.constant 0 : i32
    %c0_i32_1 = arith.constant 0 : i32
    return %c0_i32_0, %1 : i32, i32
  }
  func.func @transform_5(%arg0: i32, %arg1: i32) -> (i32, i32) {
    %c1_i32 = arith.constant 1 : i32
    %0 = arith.subi %arg1, %c1_i32 : i32
    %c0_i32 = arith.constant 0 : i32
    %1 = arith.maxsi %0, %c0_i32 : i32
    %c0_i32_0 = arith.constant 0 : i32
    return %arg0, %1 : i32, i32
  }
}

</mosaic_0001>

<llo_original>
// kernel: _cdae_forward.1
$region0: #{_cdae_forward.1}
  #allocation0 [shape = 'u32[]', space=smem, size = 0x4, offset = 0x4, fixed_abs, tag = 'smem constant byte address 0x4 - core index']
  #allocation1 [shape = 'u32[144,128]{1,0:T(1,128)}', space=vmem, size = 0x12000, scoped, tag = 'internal scratch']
  #allocation2 [shape = 'f32[8,128]{1,0:T(8,128)}', space=vmem, size = 0x1000, scoped, tag = 'scratch operand']
  %s0 = inlined_call_operand.vmem [shape: bf16[8,256], index: 0, kind: input, shape index: {}]
  %s1 = inlined_call_operand.vmem [shape: bf16[256,128], index: 1, kind: input, shape index: {}]
  %s2 = inlined_call_operand.vmem [shape: f32[8,128], index: 2, kind: input, shape index: {}]
  %s3 = inlined_call_operand.vmem [shape: bf16[128,256], index: 3, kind: input, shape index: {}]
  %s4 = inlined_call_operand.vmem [shape: f32[1,256], index: 4, kind: input, shape index: {}]
  %s5 = inlined_call_operand.hbm [shape: f32[8,256], index: 5, kind: output, shape index: {}]
  %s6 = sld [smem:[#allocation0]]
  $region69: #{_cdae_forward.1} parent=0
    _
  %s8 = ssub.s32 1, %s6
  %s9 = scalar_select 0, %s8, %s6
  $region1: #{_cdae_forward.1} parent=0
    #allocation3 [shape = 'u8[16384]{0}', space=vmem, size = 0x4000, scoped, tag = 'output window, operand 0']
    #allocation4 [shape = 's32[2]{0}', space=sflag, size = 0x8, scoped, tag = 'scoped memory for _cdae_forward.1']
    %10 = vsyncpa [#allocation4], 0
    %s11 = scalar_lea.sflag [#allocation4], 1
    %12 = vsyncpa %s11, 0
    loop: start=0, step=1, limit=4
    $region2: #{_cdae_forward.1} parent=1 // loop_pre_header
      _
    $region3: #{_cdae_forward.1} parent=1 // loop_header
      %s14 = sphi 0, %s18
      %p15 = scmp.ge.s32.totalorder %s14, 4
      %s21 = sphi 0, %s33
      %s22 = sphi 0, %s29
      %s23 = sphi 0, %s21
      %s24 = sphi 0, %s22
      %s25 = sphi 0, %s23
      %s26 = sphi 0, %s24
      %s42 = sphi 0, %s44
      %s45 = sphi 0, %s42
      %s46 = sphi 0, %s45
      %s62 = sphi 0, %s46
      %s72 = sphi 0, %s74
      %s75 = sphi 0, %s72
      %s76 = sphi 0, %s75
      %s92 = sphi 0, %s76
      %s98 = sphi 0, %s100
      %s101 = sphi 0, %s98
      %s102 = sphi 0, %s101
      %s118 = sphi 0, %s102
      %s130 = sphi 0, %s132
      %s133 = sphi 0, %s130
      %s134 = sphi 0, %s133
      %s150 = sphi 0, %s134
      %s162 = sphi 0, %s164
      %s165 = sphi 0, %s162
      %s166 = sphi 0, %s165
      %s182 = sphi 0, %s166
      %s196 = sphi 0, %s198
      %s199 = sphi 0, %s196
      %s200 = sphi 0, %s199
      %s216 = sphi 0, %s200
    $region4: #{_cdae_forward.1} parent=1 // loop_header_branch
      %17 = sbr.rel (%p15) target = $region8
    $region5: #{_cdae_forward.1} parent=1 // loop_body
      %s19 = ssub.s32 %s14, 1
      %s20 = ssub.s32 %s14, 2
      %s27 = sadd.s32 1, %s22
      %p28 = scmp.ge.s32.totalorder %s27, 2
      %s29 = scalar_select %p28, 0, %s27
      %s30 = sadd.s32 1, %s21
      %s31 = scalar_select %p28, %s30, %s21
      %p32 = scmp.ge.s32.totalorder %s31, 1
      %s33 = scalar_select %p32, 0, %s31
      %p34 = scmp.lt.s32.totalorder %s22, 0
      %s35 = scalar_select %p34, %s22, 0
      %p36 = scmp.lt.s32.totalorder %s29, 0
      %s37 = scalar_select %p36, %s29, 0
      %s38 = ssub.s32 %s21, %s33
      %s39 = ssub.s32 %s35, %s37
      %s40 = sor.u32 %s38, %s39
      %p41 = scmp.eq.s32.totalorder %s40, 0
      %s43 = sadd.s32 %s42, 1
      %s44 = scalar_select %p41, %s42, %s43
      %p47 = pneg %p41
      %p48 = scmp.eq.s32.totalorder %s14, 1
      %p49 = por %p47, %p48
      %p50 = scmp.ne.s32.totalorder %s42, %s45
      %p51 = scmp.eq.s32.totalorder %s14, 0
      %p52 = por %p50, %p51
      %p53 = scmp.ne.s32.totalorder %s42, %s45
      %p54 = scmp.eq.s32.totalorder %s19, 1
      %p55 = por %p53, %p54
      %p56 = scmp.ne.s32.totalorder %s45, %s46
      %p57 = scmp.eq.s32.totalorder %s19, 0
      %p58 = por %p56, %p57
      %p59 = scmp.ne.s32.totalorder %s45, %s46
      %p60 = scmp.eq.s32.totalorder %s20, 1
      %p61 = por %p59, %p60
      %p63 = scmp.ne.s32.totalorder %s46, %s62
      %p64 = scmp.eq.s32.totalorder %s20, 0
      %p65 = por %p63, %p64
      %p66 = scmp.lt.s32.totalorder %s22, 0
      %s67 = scalar_select %p66, %s22, 0
      %p68 = scmp.lt.s32.totalorder %s29, 0
      %s69 = scalar_select %p68, %s29, 0
      %s70 = ssub.s32 %s67, %s69
      %p71 = scmp.eq.s32.totalorder %s70, 0
      %s73 = sadd.s32 %s72, 1
      %s74 = scalar_select %p71, %s72, %s73
      %p77 = pneg %p71
      %p78 = scmp.eq.s32.totalorder %s14, 1
      %p79 = por %p77, %p78
      %p80 = scmp.ne.s32.totalorder %s72, %s75
      %p81 = scmp.eq.s32.totalorder %s14, 0
      %p82 = por %p80, %p81
      %p83 = scmp.ne.s32.totalorder %s72, %s75
      %p84 = scmp.eq.s32.totalorder %s19, 1
      %p85 = por %p83, %p84
      %p86 = scmp.ne.s32.totalorder %s75, %s76
      %p87 = scmp.eq.s32.totalorder %s19, 0
      %p88 = por %p86, %p87
      %p89 = scmp.ne.s32.totalorder %s75, %s76
      %p90 = scmp.eq.s32.totalorder %s20, 1
      %p91 = por %p89, %p90
      %p93 = scmp.ne.s32.totalorder %s76, %s92
      %p94 = scmp.eq.s32.totalorder %s20, 0
      %p95 = por %p93, %p94
      %s96 = ssub.s32 %s21, %s33
      %p97 = scmp.eq.s32.totalorder %s96, 0
      %s99 = sadd.s32 %s98, 1
      %s100 = scalar_select %p97, %s98, %s99
      %p103 = pneg %p97
      %p104 = scmp.eq.s32.totalorder %s14, 1
      %p105 = por %p103, %p104
      %p106 = scmp.ne.s32.totalorder %s98, %s101
      %p107 = scmp.eq.s32.totalorder %s14, 0
      %p108 = por %p106, %p107
      %p109 = scmp.ne.s32.totalorder %s98, %s101
      %p110 = scmp.eq.s32.totalorder %s19, 1
      %p111 = por %p109, %p110
      %p112 = scmp.ne.s32.totalorder %s101, %s102
      %p113 = scmp.eq.s32.totalorder %s19, 0
      %p114 = por %p112, %p113
      %p115 = scmp.ne.s32.totalorder %s101, %s102
      %p116 = scmp.eq.s32.totalorder %s20, 1
      %p117 = por %p115, %p116
      %p119 = scmp.ne.s32.totalorder %s102, %s118
      %p120 = scmp.eq.s32.totalorder %s20, 0
      %p121 = por %p119, %p120
      %s122 = ssub.s32 %s22, 1
      %p123 = scmp.gt.s32.totalorder %s122, 0
      %s124 = scalar_select %p123, %s122, 0
      %s125 = ssub.s32 %s29, 1
      %p126 = scmp.gt.s32.totalorder %s125, 0
      %s127 = scalar_select %p126, %s125, 0
      %s128 = ssub.s32 %s124, %s127
      %p129 = scmp.eq.s32.totalorder %s128, 0
      %s131 = sadd.s32 %s130, 1
      %s132 = scalar_select %p129, %s130, %s131
      %p135 = pneg %p129
      %p136 = scmp.eq.s32.totalorder %s14, 1
      %p137 = por %p135, %p136
      %p138 = scmp.ne.s32.totalorder %s130, %s133
      %p139 = scmp.eq.s32.totalorder %s14, 0
      %p140 = por %p138, %p139
      %p141 = scmp.ne.s32.totalorder %s130, %s133
      %p142 = scmp.eq.s32.totalorder %s19, 1
      %p143 = por %p141, %p142
      %p144 = scmp.ne.s32.totalorder %s133, %s134
      %p145 = scmp.eq.s32.totalorder %s19, 0
      %p146 = por %p144, %p145
      %p147 = scmp.ne.s32.totalorder %s133, %s134
      %p148 = scmp.eq.s32.totalorder %s20, 1
      %p149 = por %p147, %p148
      %p151 = scmp.ne.s32.totalorder %s134, %s150
      %p152 = scmp.eq.s32.totalorder %s20, 0
      %p153 = por %p151, %p152
      %s154 = ssub.s32 %s22, 1
      %p155 = scmp.gt.s32.totalorder %s154, 0
      %s156 = scalar_select %p155, %s154, 0
      %s157 = ssub.s32 %s29, 1
      %p158 = scmp.gt.s32.totalorder %s157, 0
      %s159 = scalar_select %p158, %s157, 0
      %s160 = ssub.s32 %s156, %s159
      %p161 = scmp.eq.s32.totalorder %s160, 0
      %s163 = sadd.s32 %s162, 1
      %s164 = scalar_select %p161, %s162, %s163
      %p167 = pneg %p161
      %p168 = scmp.eq.s32.totalorder %s14, 1
      %p169 = por %p167, %p168
      %p170 = scmp.ne.s32.totalorder %s162, %s165
      %p171 = scmp.eq.s32.totalorder %s14, 0
      %p172 = por %p170, %p171
      %p173 = scmp.ne.s32.totalorder %s162, %s165
      %p174 = scmp.eq.s32.totalorder %s19, 1
      %p175 = por %p173, %p174
      %p176 = scmp.ne.s32.totalorder %s165, %s166
      %p177 = scmp.eq.s32.totalorder %s19, 0
      %p178 = por %p176, %p177
      %p179 = scmp.ne.s32.totalorder %s165, %s166
      %p180 = scmp.eq.s32.totalorder %s20, 1
      %p181 = por %p179, %p180
      %p183 = scmp.ne.s32.totalorder %s166, %s182
      %p184 = scmp.eq.s32.totalorder %s20, 0
      %p185 = por %p183, %p184
      %s186 = ssub.s32 %s22, 1
      %p187 = scmp.gt.s32.totalorder %s186, 0
      %s188 = scalar_select %p187, %s186, 0
      %s189 = ssub.s32 %s29, 1
      %p190 = scmp.gt.s32.totalorder %s189, 0
      %s191 = scalar_select %p190, %s189, 0
      %s192 = ssub.s32 %s21, %s33
      %s193 = ssub.s32 %s188, %s191
      %s194 = sor.u32 %s192, %s193
      %p195 = scmp.eq.s32.totalorder %s194, 0
      %s197 = sadd.s32 %s196, 1
      %s198 = scalar_select %p195, %s196, %s197
      %p201 = pneg %p195
      %p202 = scmp.eq.s32.totalorder %s14, 1
      %p203 = por %p201, %p202
      %p204 = scmp.ne.s32.totalorder %s196, %s199
      %p205 = scmp.eq.s32.totalorder %s14, 0
      %p206 = por %p204, %p205
      %p207 = scmp.ne.s32.totalorder %s196, %s199
      %p208 = scmp.eq.s32.totalorder %s19, 1
      %p209 = por %p207, %p208
      %p210 = scmp.ne.s32.totalorder %s199, %s200
      %p211 = scmp.eq.s32.totalorder %s19, 0
      %p212 = por %p210, %p211
      %p213 = scmp.ne.s32.totalorder %s199, %s200
      %p214 = scmp.eq.s32.totalorder %s20, 1
      %p215 = por %p213, %p214
      %p217 = scmp.ne.s32.totalorder %s200, %s216
      %p218 = scmp.eq.s32.totalorder %s20, 0
      %p219 = por %p217, %p218
      %p220 = scmp.le.s32.totalorder 1, %s14
      %p221 = scmp.lt.s32.totalorder %s14, 3
      %p222 = pnand %p220, %p221
      %p223 = pneg %p222
      // Predicated region
      $region9: #{_cdae_forward.1} parent=5 // pred_check
        _
      $region10: #{_cdae_forward.1} parent=5 // pred_check_branch
        %225 = sbr.rel (%p222) target = $region12
      $region11: #{_cdae_forward.1} parent=5 // pred_region
        %s226 = ssub.s32 %s14, 1
        // Predicated region
        $region13: #{_cdae_forward.1} parent=11 // pred_check
          %p227 = pneg %p114
        $region14: #{_cdae_forward.1} parent=11 // pred_check_branch
          %229 = sbr.rel (%p227) target = $region16
        $region15: #{_cdae_forward.1} parent=11 // pred_region
          %p230 = scmp.lt.s32.totalorder %s23, 0
          %s231 = scalar_select %p230, %s23, 0
          %s232 = smul.addr %s231, 8
          %s233 = scalar_lea.vmem %s2, %s232
        $region16: #{_cdae_forward.1} parent=11 // pred_fallthru
          _
      $region12: #{_cdae_forward.1} parent=5 // pred_fallthru
        _
      %p234 = scmp.lt.s32.totalorder %s14, 2
      // Predicated region
      $region17: #{_cdae_forward.1} parent=5 // pred_check
        %p235 = pneg %p234
      $region18: #{_cdae_forward.1} parent=5 // pred_check_branch
        %237 = sbr.rel (%p235) target = $region20
      $region19: #{_cdae_forward.1} parent=5 // pred_region
        // Predicated region
        $region21: #{_cdae_forward.1} parent=19 // pred_check
          %p238 = pneg %p52
        $region22: #{_cdae_forward.1} parent=19 // pred_check_branch
          %240 = sbr.rel (%p238) target = $region24
        $region23: #{_cdae_forward.1} parent=19 // pred_region
          %p241 = scmp.lt.s32.totalorder %s22, 0
          %s242 = scalar_select %p241, %s22, 0
          %s243 = smul.u32 2, %s242
          %p244 = scmp.lt.s32.totalorder %s21, 0
          %s245 = scalar_select %p244, %s21, 0
          %p246 = scmp.lt.s32.totalorder %s243, 1
          %s247 = scalar_select %p246, %s243, 1
          %s248 = smul.addr %s245, 2
          %s249 = sadd.s32 %s247, %s248
          %s250 = smul.addr %s249, 4
          %s251 = scalar_lea.vmem %s0, %s250
          %p252 = scmp.lt.s32.totalorder %s22, 0
          %s253 = scalar_select %p252, %s22, 0
          %s254 = smul.u32 2, %s253
        $region24: #{_cdae_forward.1} parent=19 // pred_fallthru
          _
        // Predicated region
        $region25: #{_cdae_forward.1} parent=19 // pred_check
          %p255 = pneg %p82
        $region26: #{_cdae_forward.1} parent=19 // pred_check_branch
          %257 = sbr.rel (%p255) target = $region28
        $region27: #{_cdae_forward.1} parent=19 // pred_region
          %p258 = scmp.lt.s32.totalorder %s22, 0
          %s259 = scalar_select %p258, %s22, 0
          %s260 = smul.u32 32, %s259
          %p261 = scmp.lt.s32.totalorder %s260, 31
          %s262 = scalar_select %p261, %s260, 31
          %s263 = smul.addr %s262, 4
          %s264 = scalar_lea.vmem %s1, %s263
          %p265 = scmp.lt.s32.totalorder %s22, 0
          %s266 = scalar_select %p265, %s22, 0
          %s267 = smul.u32 32, %s266
        $region28: #{_cdae_forward.1} parent=19 // pred_fallthru
          _
        // Predicated region
        $region29: #{_cdae_forward.1} parent=19 // pred_check
          %p268 = pneg %p140
        $region30: #{_cdae_forward.1} parent=19 // pred_check_branch
          %270 = sbr.rel (%p268) target = $region32
        $region31: #{_cdae_forward.1} parent=19 // pred_region
          %s271 = ssub.s32 %s22, 1
          %p272 = scmp.gt.s32.totalorder %s271, 0
          %s273 = scalar_select %p272, %s271, 0
          %s274 = smul.u32 2, %s273
          %p275 = scmp.lt.s32.totalorder %s274, 1
          %s276 = scalar_select %p275, %s274, 1
          %s277 = smul.addr %s276, 4
          %s278 = scalar_lea.vmem %s3, %s277
          %s279 = ssub.s32 %s22, 1
          %p280 = scmp.gt.s32.totalorder %s279, 0
          %s281 = scalar_select %p280, %s279, 0
          %s282 = smul.u32 2, %s281
        $region32: #{_cdae_forward.1} parent=19 // pred_fallthru
          _
        // Predicated region
        $region33: #{_cdae_forward.1} parent=19 // pred_check
          %p283 = pneg %p172
        $region34: #{_cdae_forward.1} parent=19 // pred_check_branch
          %285 = sbr.rel (%p283) target = $region36
        $region35: #{_cdae_forward.1} parent=19 // pred_region
          %s286 = ssub.s32 %s22, 1
          %p287 = scmp.gt.s32.totalorder %s286, 0
          %s288 = scalar_select %p287, %s286, 0
          %s289 = smul.u32 2, %s288
          %p290 = scmp.lt.s32.totalorder %s289, 1
          %s291 = scalar_select %p290, %s289, 1
          %s292 = scalar_lea.vmem %s4, %s291
          %s293 = ssub.s32 %s22, 1
          %p294 = scmp.gt.s32.totalorder %s293, 0
          %s295 = scalar_select %p294, %s293, 0
          %s296 = smul.u32 2, %s295
        $region36: #{_cdae_forward.1} parent=19 // pred_fallthru
          _
      $region20: #{_cdae_forward.1} parent=5 // pred_fallthru
        _
      %p297 = scmp.le.s32.totalorder 1, %s14
      %p298 = scmp.lt.s32.totalorder %s14, 3
      %p299 = pnand %p297, %p298
      %p300 = pneg %p299
      // Predicated region
      $region37: #{_cdae_forward.1} parent=5 // pred_check
        _
      $region38: #{_cdae_forward.1} parent=5 // pred_check_branch
        %302 = sbr.rel (%p299) target = $region40
      $region39: #{_cdae_forward.1} parent=5 // pred_region
        %s303 = ssub.s32 %s14, 1
        %p304 = scmp.lt.s32.totalorder %s24, 0
        %s305 = scalar_select %p304, %s24, 0
        %s306 = smul.u32 2, %s305
        %p307 = scmp.lt.s32.totalorder %s23, 0
        %s308 = scalar_select %p307, %s23, 0
        %p309 = scmp.lt.s32.totalorder %s306, 1
        %s310 = scalar_select %p309, %s306, 1
        %s311 = smul.addr %s308, 2
        %s312 = sadd.s32 %s310, %s311
        %s313 = smul.addr %s312, 4
        %s314 = scalar_lea.vmem %s0, %s313
        %p315 = pneg %p58
        %p316 = pneg %p55
        %p317 = scmp.lt.s32.totalorder %s24, 0
        %s318 = scalar_select %p317, %s24, 0
        %s319 = smul.u32 32, %s318
        %p320 = scmp.lt.s32.totalorder %s319, 31
        %s321 = scalar_select %p320, %s319, 31
        %s322 = smul.addr %s321, 4
        %s323 = scalar_lea.vmem %s1, %s322
        %p324 = pneg %p88
        %p325 = pneg %p85
        %p326 = scmp.lt.s32.totalorder %s23, 0
        %s327 = scalar_select %p326, %s23, 0
        %s328 = smul.addr %s327, 8
        %s329 = scalar_lea.vmem %s2, %s328
        %p330 = pneg %p114
        %p331 = pneg %p111
        %s332 = ssub.s32 %s24, 1
        %p333 = scmp.gt.s32.totalorder %s332, 0
        %s334 = scalar_select %p333, %s332, 0
        %s335 = smul.u32 2, %s334
        %p336 = scmp.lt.s32.totalorder %s335, 1
        %s337 = scalar_select %p336, %s335, 1
        %s338 = smul.addr %s337, 4
        %s339 = scalar_lea.vmem %s3, %s338
        %p340 = pneg %p146
        %p341 = pneg %p143
        %s342 = ssub.s32 %s24, 1
        %p343 = scmp.gt.s32.totalorder %s342, 0
        %s344 = scalar_select %p343, %s342, 0
        %s345 = smul.u32 2, %s344
        %p346 = scmp.lt.s32.totalorder %s345, 1
        %s347 = scalar_select %p346, %s345, 1
        %s348 = scalar_lea.vmem %s4, %s347
        %p349 = pneg %p178
        %p350 = pneg %p175
        %p351 = pneg %p212
        %p352 = pneg %p209
        %s353 = sand.u32 %s199, 1
        %s354 = scalar_lea.sflag [#allocation4], %s353
        %s355 = sand.u32 %s199, 1
        %s356 = smul.addr %s355, 16
        %s357 = scalar_lea.vmem [#allocation3], %s356
        %p358 = scmp.lt.s32.totalorder %s24, 0
        %s359 = scalar_select %p358, %s24, 0
        %s360 = smul.u32 2, %s359
        %p361 = scmp.lt.s32.totalorder %s23, 0
        %s362 = scalar_select %p361, %s23, 0
        %p363 = scmp.lt.s32.totalorder %s360, 1
        %s364 = scalar_select %p363, %s360, 1
        %s365 = smul.addr %s362, 2
        %s366 = sadd.s32 %s364, %s365
        %s367 = smul.addr %s366, 4
        %s368 = scalar_lea.vmem %s0, %s367
        %p369 = scmp.lt.s32.totalorder %s24, 0
        %s370 = scalar_select %p369, %s24, 0
        %s371 = smul.u32 2, %s370
        %p372 = scmp.lt.s32.totalorder %s24, 0
        %s373 = scalar_select %p372, %s24, 0
        %s374 = smul.u32 32, %s373
        %p375 = scmp.lt.s32.totalorder %s374, 31
        %s376 = scalar_select %p375, %s374, 31
        %s377 = smul.addr %s376, 4
        %s378 = scalar_lea.vmem %s1, %s377
        %p379 = scmp.lt.s32.totalorder %s24, 0
        %s380 = scalar_select %p379, %s24, 0
        %s381 = smul.u32 32, %s380
        %p382 = scmp.lt.s32.totalorder %s23, 0
        %s383 = scalar_select %p382, %s23, 0
        %s384 = smul.addr %s383, 8
        %s385 = scalar_lea.vmem %s2, %s384
        %s386 = ssub.s32 %s24, 1
        %p387 = scmp.gt.s32.totalorder %s386, 0
        %s388 = scalar_select %p387, %s386, 0
        %s389 = smul.u32 2, %s388
        %p390 = scmp.lt.s32.totalorder %s389, 1
        %s391 = scalar_select %p390, %s389, 1
        %s392 = smul.addr %s391, 4
        %s393 = scalar_lea.vmem %s3, %s392
        %s394 = ssub.s32 %s24, 1
        %p395 = scmp.gt.s32.totalorder %s394, 0
        %s396 = scalar_select %p395, %s394, 0
        %s397 = smul.u32 2, %s396
        %s398 = ssub.s32 %s24, 1
        %p399 = scmp.gt.s32.totalorder %s398, 0
        %s400 = scalar_select %p399, %s398, 0
        %s401 = smul.u32 2, %s400
        %p402 = scmp.lt.s32.totalorder %s401, 1
        %s403 = scalar_select %p402, %s401, 1
        %s404 = scalar_lea.vmem %s4, %s403
        %s405 = ssub.s32 %s24, 1
        %p406 = scmp.gt.s32.totalorder %s405, 0
        %s407 = scalar_select %p406, %s405, 0
        %s408 = smul.u32 2, %s407
        %s409 = ssub.s32 %s24, 1
        %p410 = scmp.gt.s32.totalorder %s409, 0
        %s411 = scalar_select %p410, %s409, 0
        %s412 = smul.u32 2, %s411
        %p414 = scmp.eq.s32.totalorder %s24, 0
        // Predicated region
        $region41: #{_cdae_forward.1} parent=39 // pred_check
          %p415 = pneg %p414
        $region42: #{_cdae_forward.1} parent=39 // pred_check_branch
          %417 = sbr.rel (%p415) target = $region44
        $region43: #{_cdae_forward.1} parent=39 // pred_region
          %v418 = vld [vmem:[%s385] sm:$0xff]
          %419 = vst [vmem:[#allocation2] sm:$0xff] %v418
        $region44: #{_cdae_forward.1} parent=39 // pred_fallthru
          _
        %p420 = scmp.lt.s32.totalorder %s24, 1
        // Predicated region
        $region45: #{_cdae_forward.1} parent=39 // pred_check
          %p421 = pneg %p420
        $region46: #{_cdae_forward.1} parent=39 // pred_check_branch
          %423 = sbr.rel (%p421) target = $region48
        $region47: #{_cdae_forward.1} parent=39 // pred_region
          %v424 = vld [vmem:[#allocation2] sm:$0xff]
          %v425 = vld [vmem:[%s368] sm:$0xff]
          %v426 = vld [vmem:[%s378] sm:$0xf]
          %v427 = vld [vmem:[%s378 + $0x4] sm:$0xf]
          %v428 = vld [vmem:[%s378 + $0x8] sm:$0xf]
          %v429 = vld [vmem:[%s378 + $0xc] sm:$0xf]
          %v430 = vld [vmem:[%s378 + $0x10] sm:$0xf]
          %v431 = vld [vmem:[%s378 + $0x14] sm:$0xf]
          %v432 = vld [vmem:[%s378 + $0x18] sm:$0xf]
          %v433 = vld [vmem:[%s378 + $0x1c] sm:$0xf]
          %v434 = vld [vmem:[%s378 + $0x20] sm:$0xf]
          %v435 = vld [vmem:[%s378 + $0x24] sm:$0xf]
          %v436 = vld [vmem:[%s378 + $0x28] sm:$0xf]
          %v437 = vld [vmem:[%s378 + $0x2c] sm:$0xf]
          %v438 = vld [vmem:[%s378 + $0x30] sm:$0xf]
          %v439 = vld [vmem:[%s378 + $0x34] sm:$0xf]
          %v440 = vld [vmem:[%s378 + $0x38] sm:$0xf]
          %v441 = vld [vmem:[%s378 + $0x3c] sm:$0xf]
          %v442 = vld [vmem:[%s378 + $0x40] sm:$0xf]
          %v443 = vld [vmem:[%s378 + $0x44] sm:$0xf]
          %v444 = vld [vmem:[%s378 + $0x48] sm:$0xf]
          %v445 = vld [vmem:[%s378 + $0x4c] sm:$0xf]
          %v446 = vld [vmem:[%s378 + $0x50] sm:$0xf]
          %v447 = vld [vmem:[%s378 + $0x54] sm:$0xf]
          %v448 = vld [vmem:[%s378 + $0x58] sm:$0xf]
          %v449 = vld [vmem:[%s378 + $0x5c] sm:$0xf]
          %v450 = vld [vmem:[%s378 + $0x60] sm:$0xf]
          %v451 = vld [vmem:[%s378 + $0x64] sm:$0xf]
          %v452 = vld [vmem:[%s378 + $0x68] sm:$0xf]
          %v453 = vld [vmem:[%s378 + $0x6c] sm:$0xf]
          %v454 = vld [vmem:[%s378 + $0x70] sm:$0xf]
          %v455 = vld [vmem:[%s378 + $0x74] sm:$0xf]
          %v456 = vld [vmem:[%s378 + $0x78] sm:$0xf]
          %v457 = vld [vmem:[%s378 + $0x7c] sm:$0xf]
          %v459 = vunpack.c.l.b16 %v425
          %v460 = vunpack.c.h.b16 %v425
          %v461 = vpack.c.b16 %v459, %v459
          %v462 = vpack.c.b16 %v460, %v460
          %v497 = vunpack.c.l.b16 %v426
          %v498 = vunpack.c.l.b16 %v427
          %v499 = vunpack.c.l.b16 %v428
          %v500 = vunpack.c.l.b16 %v429
          %v501 = vunpack.c.l.b16 %v430
          %v502 = vunpack.c.l.b16 %v431
          %v503 = vunpack.c.l.b16 %v432
          %v504 = vunpack.c.l.b16 %v433
          %v505 = vunpack.c.l.b16 %v434
          %v506 = vunpack.c.l.b16 %v435
          %v507 = vunpack.c.l.b16 %v436
          %v508 = vunpack.c.l.b16 %v437
          %v509 = vunpack.c.l.b16 %v438
          %v510 = vunpack.c.l.b16 %v439
          %v511 = vunpack.c.l.b16 %v440
          %v512 = vunpack.c.l.b16 %v441
          %v513 = vunpack.c.l.b16 %v442
          %v514 = vunpack.c.l.b16 %v443
          %v515 = vunpack.c.l.b16 %v444
          %v516 = vunpack.c.l.b16 %v445
          %v517 = vunpack.c.l.b16 %v446
          %v518 = vunpack.c.l.b16 %v447
          %v519 = vunpack.c.l.b16 %v448
          %v520 = vunpack.c.l.b16 %v449
          %v521 = vunpack.c.l.b16 %v450
          %v522 = vunpack.c.l.b16 %v451
          %v523 = vunpack.c.l.b16 %v452
          %v524 = vunpack.c.l.b16 %v453
          %v525 = vunpack.c.l.b16 %v454
          %v526 = vunpack.c.l.b16 %v455
          %v527 = vunpack.c.l.b16 %v456
          %v528 = vunpack.c.l.b16 %v457
          %v529 = vpack.c.b16 %v498, %v497
          %v530 = vpack.c.b16 %v500, %v499
          %v531 = vpack.c.b16 %v502, %v501
          %v532 = vpack.c.b16 %v504, %v503
          %v533 = vpack.c.b16 %v506, %v505
          %v534 = vpack.c.b16 %v508, %v507
          %v535 = vpack.c.b16 %v510, %v509
          %v536 = vpack.c.b16 %v512, %v511
          %v537 = vpack.c.b16 %v514, %v513
          %v538 = vpack.c.b16 %v516, %v515
          %v539 = vpack.c.b16 %v518, %v517
          %v540 = vpack.c.b16 %v520, %v519
          %v541 = vpack.c.b16 %v522, %v521
          %v542 = vpack.c.b16 %v524, %v523
          %v543 = vpack.c.b16 %v526, %v525
          %v544 = vpack.c.b16 %v528, %v527
          %561 = vmatprep.subr.bf16.mxu0 0
          %562 = vmatpush1.bf16.msra.mxu0 %v529
          %563 = vmatprep.subr.bf16.mxu0 0
          %564 = vmatpush1.bf16.msra.mxu0 %v530
          %565 = vmatprep.subr.bf16.mxu0 0
          %566 = vmatpush1.bf16.msra.mxu0 %v531
          %567 = vmatprep.subr.bf16.mxu0 0
          %568 = vmatpush1.bf16.msra.mxu0 %v532
          %569 = vmatprep.subr.bf16.mxu0 0
          %570 = vmatpush1.bf16.msra.mxu0 %v533
          %571 = vmatprep.subr.bf16.mxu0 0
          %572 = vmatpush1.bf16.msra.mxu0 %v534
          %573 = vmatprep.subr.bf16.mxu0 0
          %574 = vmatpush1.bf16.msra.mxu0 %v535
          %575 = vmatprep.subr.bf16.mxu0 0
          %576 = vmatpush1.bf16.msra.mxu0 %v536
          %577 = vmatprep.subr.bf16.mxu0 0
          %578 = vmatpush1.bf16.msra.mxu0 %v537
          %579 = vmatprep.subr.bf16.mxu0 0
          %580 = vmatpush1.bf16.msra.mxu0 %v538
          %581 = vmatprep.subr.bf16.mxu0 0
          %582 = vmatpush1.bf16.msra.mxu0 %v539
          %583 = vmatprep.subr.bf16.mxu0 0
          %584 = vmatpush1.bf16.msra.mxu0 %v540
          %585 = vmatprep.subr.bf16.mxu0 0
          %586 = vmatpush1.bf16.msra.mxu0 %v541
          %587 = vmatprep.subr.bf16.mxu0 0
          %588 = vmatpush1.bf16.msra.mxu0 %v542
          %589 = vmatprep.subr.bf16.mxu0 0
          %590 = vmatpush1.bf16.msra.mxu0 %v543
          %591 = vmatprep.subr.bf16.mxu0 0
          %592 = vmatpush1.bf16.msra.mxu0 %v544
          %593 = vmatprep.mubr.bf16.mxu0 %v462
          %594 = vmatmul.mubr.bf16.gmra.mrb[0].mxu0 %v461
          %v595 = vpop.f32.mrb[0].mxu0
          %v596 = vadd.f32 0.0, %v595
          %v597 = vpop.f32.mrb[0].mxu0
          %v598 = vpop.f32.mrb[0].mxu0
          %v599 = vpop.f32.mrb[0].mxu0
          %600 = vdwg.mxu0
          %v601 = vadd.f32 %v424, %v596
          %602 = vst [vmem:[#allocation2] sm:$0xff] %v601
        $region48: #{_cdae_forward.1} parent=39 // pred_fallthru
          _
        // Predicated region
        $region49: #{_cdae_forward.1} parent=39 // pred_check
          %p603 = pneg %p414
        $region50: #{_cdae_forward.1} parent=39 // pred_check_branch
          %605 = sbr.rel (%p603) target = $region52
        $region51: #{_cdae_forward.1} parent=39 // pred_region
          %v606 = vld [vmem:[#allocation2] sm:$0xff]
          %v607 = vxor.u32 %v606, 2147483648
          %v608 = vmul.f32 %v607, 1.442695
          %v609 = vpow.pop %v608
          %v610 = vadd.f32 %v609, 1.0
          %v611 = vrcp.pop %v610
          %v612 = vmul.f32 1.0, %v611
          %613 = vst [vmem:[#allocation2] sm:$0xff] %v612
        $region52: #{_cdae_forward.1} parent=39 // pred_fallthru
          _
        %p614 = scmp.ge.s32.totalorder %s24, 1
        // Predicated region
        $region53: #{_cdae_forward.1} parent=39 // pred_check
          %p615 = pneg %p614
        $region54: #{_cdae_forward.1} parent=39 // pred_check_branch
          %617 = sbr.rel (%p615) target = $region56
        $region55: #{_cdae_forward.1} parent=39 // pred_region
          %v618 = vld [vmem:[#allocation2] sm:$0xff]
          %v619 = vpack.c.bf16 %v618, %v618
          %v620 = vld [vmem:[%s393] sm:$0xff]
          %v621 = vld [vmem:[%s393 + $0x8] sm:$0xff]
          %v622 = vld [vmem:[%s393 + $0x10] sm:$0xff]
          %v623 = vld [vmem:[%s393 + $0x18] sm:$0xff]
          %v624 = vld [vmem:[%s393 + $0x20] sm:$0xff]
          %v625 = vld [vmem:[%s393 + $0x28] sm:$0xff]
          %v626 = vld [vmem:[%s393 + $0x30] sm:$0xff]
          %v627 = vld [vmem:[%s393 + $0x38] sm:$0xff]
          %v628 = vld [vmem:[%s393 + $0x40] sm:$0xff]
          %v629 = vld [vmem:[%s393 + $0x48] sm:$0xff]
          %v630 = vld [vmem:[%s393 + $0x50] sm:$0xff]
          %v631 = vld [vmem:[%s393 + $0x58] sm:$0xff]
          %v632 = vld [vmem:[%s393 + $0x60] sm:$0xff]
          %v633 = vld [vmem:[%s393 + $0x68] sm:$0xff]
          %v634 = vld [vmem:[%s393 + $0x70] sm:$0xff]
          %v635 = vld [vmem:[%s393 + $0x78] sm:$0xff]
          %v636 = vld [vmem:[%s404] sm:$0x3]
          %v638 = vlaneseq
          %v639 = vshrl.u32 %v638, 7
          %v640 = vsub.s32 0, %v639
          %v641 = vrot.slane %v636, %v640
          %v642 = vlaneseq
          %v643 = vshrl.u32 %v642, 7
          %v644 = vsub.s32 1, %v643
          %v645 = vrot.slane %v636, %v644
          %v664 = vunpack.c.l.b16 %v620
          %v665 = vunpack.c.h.b16 %v620
          %v666 = vunpack.c.l.b16 %v621
          %v667 = vunpack.c.h.b16 %v621
          %v668 = vunpack.c.l.b16 %v622
          %v669 = vunpack.c.h.b16 %v622
          %v670 = vunpack.c.l.b16 %v623
          %v671 = vunpack.c.h.b16 %v623
          %v672 = vunpack.c.l.b16 %v624
          %v673 = vunpack.c.h.b16 %v624
          %v674 = vunpack.c.l.b16 %v625
          %v675 = vunpack.c.h.b16 %v625
          %v676 = vunpack.c.l.b16 %v626
          %v677 = vunpack.c.h.b16 %v626
          %v678 = vunpack.c.l.b16 %v627
          %v679 = vunpack.c.h.b16 %v627
          %v680 = vunpack.c.l.b16 %v628
          %v681 = vunpack.c.h.b16 %v628
          %v682 = vunpack.c.l.b16 %v629
          %v683 = vunpack.c.h.b16 %v629
          %v684 = vunpack.c.l.b16 %v630
          %v685 = vunpack.c.h.b16 %v630
          %v686 = vunpack.c.l.b16 %v631
          %v687 = vunpack.c.h.b16 %v631
          %v688 = vunpack.c.l.b16 %v632
          %v689 = vunpack.c.h.b16 %v632
          %v690 = vunpack.c.l.b16 %v633
          %v691 = vunpack.c.h.b16 %v633
          %v692 = vunpack.c.l.b16 %v634
          %v693 = vunpack.c.h.b16 %v634
          %v694 = vunpack.c.l.b16 %v635
          %v695 = vunpack.c.h.b16 %v635
          %v696 = vpack.c.b16 %v666, %v664
          %v697 = vpack.c.b16 %v667, %v665
          %v698 = vpack.c.b16 %v670, %v668
          %v699 = vpack.c.b16 %v671, %v669
          %v700 = vpack.c.b16 %v674, %v672
          %v701 = vpack.c.b16 %v675, %v673
          %v702 = vpack.c.b16 %v678, %v676
          %v703 = vpack.c.b16 %v679, %v677
          %v704 = vpack.c.b16 %v682, %v680
          %v705 = vpack.c.b16 %v683, %v681
          %v706 = vpack.c.b16 %v686, %v684
          %v707 = vpack.c.b16 %v687, %v685
          %v708 = vpack.c.b16 %v690, %v688
          %v709 = vpack.c.b16 %v691, %v689
          %v710 = vpack.c.b16 %v694, %v692
          %v711 = vpack.c.b16 %v695, %v693
          %728 = vmatprep.subr.bf16.mxu0 %v697
          %729 = vmatpush1.bf16.msra.mxu0 %v696
          %730 = vmatprep.subr.bf16.mxu0 %v699
          %731 = vmatpush1.bf16.msra.mxu0 %v698
          %732 = vmatprep.subr.bf16.mxu0 %v701
          %733 = vmatpush1.bf16.msra.mxu0 %v700
          %734 = vmatprep.subr.bf16.mxu0 %v703
          %735 = vmatpush1.bf16.msra.mxu0 %v702
          %736 = vmatprep.subr.bf16.mxu0 %v705
          %737 = vmatpush1.bf16.msra.mxu0 %v704
          %738 = vmatprep.subr.bf16.mxu0 %v707
          %739 = vmatpush1.bf16.msra.mxu0 %v706
          %740 = vmatprep.subr.bf16.mxu0 %v709
          %741 = vmatpush1.bf16.msra.mxu0 %v708
          %742 = vmatprep.subr.bf16.mxu0 %v711
          %743 = vmatpush1.bf16.msra.mxu0 %v710
          %744 = vmatprep.subr.bf16.mxu0 0
          %745 = vmatpush1.bf16.msra.mxu0 0
          %746 = vmatprep.subr.bf16.mxu0 0
          %747 = vmatpush1.bf16.msra.mxu0 0
          %748 = vmatprep.subr.bf16.mxu0 0
          %749 = vmatpush1.bf16.msra.mxu0 0
          %750 = vmatprep.subr.bf16.mxu0 0
          %751 = vmatpush1.bf16.msra.mxu0 0
          %752 = vmatprep.subr.bf16.mxu0 0
          %753 = vmatpush1.bf16.msra.mxu0 0
          %754 = vmatprep.subr.bf16.mxu0 0
          %755 = vmatpush1.bf16.msra.mxu0 0
          %756 = vmatprep.subr.bf16.mxu0 0
          %757 = vmatpush1.bf16.msra.mxu0 0
          %758 = vmatprep.subr.bf16.mxu0 0
          %759 = vmatpush1.bf16.msra.mxu0 0
          %760 = vmatprep.mubr.bf16.mxu0 0
          %761 = vmatmul.mubr.bf16.gmra.mrb[0].mxu0 %v619
          %v762 = vpop.f32.mrb[0].mxu0
          %v763 = vadd.f32 %v641, %v762
          %v764 = vpop.f32.mrb[0].mxu0
          %v765 = vadd.f32 %v645, %v764
          %v766 = vpop.f32.mrb[0].mxu0
          %v767 = vpop.f32.mrb[0].mxu0
          %768 = vdwg.mxu0
          %769 = vst [vmem:[%s357] sm:$0xff] %v763
          %770 = vst [vmem:[%s357 + $0x8] sm:$0xff] %v765
        $region56: #{_cdae_forward.1} parent=39 // pred_fallthru
          _
        %s771 = sand.u32 %s199, 1
        %s772 = scalar_lea.sflag [#allocation4], %s771
        %s773 = sand.u32 %s199, 1
        %s774 = smul.addr %s773, 16
        %s775 = scalar_lea.vmem [#allocation3], %s774
        // Predicated region
        $region57: #{_cdae_forward.1} parent=39 // pred_check
          %p776 = pneg %p209
        $region58: #{_cdae_forward.1} parent=39 // pred_check_branch
          %778 = sbr.rel (%p776) target = $region60
        $region59: #{_cdae_forward.1} parent=39 // pred_region
          %s779 = ssub.s32 %s24, 1
          %p780 = scmp.gt.s32.totalorder %s779, 0
          %s781 = scalar_select %p780, %s779, 0
          %s782 = smul.u32 2, %s781
          %s784 = ssub.s32 256, 256
          %785 = vsyncadd %s772, %s784
          %s786 = smul.addr %s23, 2
          %s787 = sadd.s32 %s782, %s786
          %s788 = smul.addr %s787, 128
          %s789 = scalar_lea.hbm %s5, %s788
          %s791 = sshll.u32 %s775, 4
          %s792 = int_to_ptr.vmem [resolvable:$true] %s791
          %794 = dma.vmem_to_hbm [thread:$0]  %s792, 256, %s789, %s772
        $region60: #{_cdae_forward.1} parent=39 // pred_fallthru
          _
      $region40: #{_cdae_forward.1} parent=5 // pred_fallthru
        _
      %p795 = scmp.le.s32.totalorder 2, %s14
      // Predicated region
      $region61: #{_cdae_forward.1} parent=5 // pred_check
        %p796 = pneg %p795
      $region62: #{_cdae_forward.1} parent=5 // pred_check_branch
        %798 = sbr.rel (%p796) target = $region64
      $region63: #{_cdae_forward.1} parent=5 // pred_region
        %s799 = ssub.s32 %s14, 2
        // Predicated region
        $region65: #{_cdae_forward.1} parent=63 // pred_check
          %p800 = pneg %p215
        $region66: #{_cdae_forward.1} parent=63 // pred_check_branch
          %802 = sbr.rel (%p800) target = $region68
        $region67: #{_cdae_forward.1} parent=63 // pred_region
          %s803 = sand.u32 %s200, 1
          %s804 = scalar_lea.sflag [#allocation4], %s803
          %s805 = sand.u32 %s200, 1
          %s806 = smul.addr %s805, 16
          %s807 = scalar_lea.vmem [#allocation3], %s806
          %808 = dma.done %s804, 256
        $region68: #{_cdae_forward.1} parent=63 // pred_fallthru
          _
      $region64: #{_cdae_forward.1} parent=5 // pred_fallthru
        _
    $region6: #{_cdae_forward.1} parent=1 // loop_footer
      %s18 = sadd.s32 1, %s14
    $region7: #{_cdae_forward.1} parent=1 // loop_footer_branch
      %13 = sbr.rel target = $region3
    $region8: #{_cdae_forward.1} parent=1 // loop_exit
      _
    %809 = vsyncpa [#allocation4], 1
    %s810 = scalar_lea.sflag [#allocation4], 1
    %811 = vsyncpa %s810, 1

</llo_original>
